<compile_context>
chip_gen: v6e
topology: v6e:2x2x1
jax: 0.10.0
libtpu: 0.0.40
codegen_flags: <defaults>
</compile_context>

<pallas_src>
import functools

import jax
import jax.numpy as jnp
from jax.experimental import pallas as pl
from jax.experimental.pallas import tpu as pltpu

LANES = 128
_ROW_TILE_CAP = 1024  # 1024 rows * 128 lanes * 4 B = 512 KiB per f32 block


def _round_up(n, m):
    return ((n + m - 1) // m) * m


def _simmin_kernel(x_ref, w_ref, o_ref, *, c_const, total, row_tile,
                   steps_per_chunk, needs_mask):
    chunk = pl.program_id(0)
    step = pl.program_id(1)

    # Output block (8, 128) is resident across the "arbitrary" step axis and
    # acts as the per-chunk accumulator (P3 pattern).
    @pl.when(step == 0)
    def _():
        o_ref[...] = jnp.zeros_like(o_ref)

    x = x_ref[...].astype(jnp.float32)
    w = w_ref[...].astype(jnp.float32)
    # log(1 - x + margin) == log(C - x), C = 1 + margin folded at trace time.
    vals = jnp.log(c_const - x) * w

    if needs_mask:
        # Mask out the padded / partial-last-tile elements (undefined reads).
        base_row = (chunk * steps_per_chunk + step) * row_tile
        row = jax.lax.broadcasted_iota(jnp.int32, vals.shape, 0) + base_row
        lane = jax.lax.broadcasted_iota(jnp.int32, vals.shape, 1)
        flat = row * LANES + lane
        vals = jnp.where(flat < total, vals, jnp.float32(0.0))

    # Row-axis partial reduction into the vreg-shaped accumulator:
    # (row_tile, 128) -> (row_tile//8, 8, 128) -> sum over leading axis.
    # This is tile-aligned, so it is pure VPU vreg adds (no XLU in the loop).
    o_ref[...] += vals.reshape(-1, 8, LANES).sum(axis=0)


def simmin_loss(x, weights, margin=0.0, *, row_tile_cap=_ROW_TILE_CAP):
    """Computes -(log(1 - x + margin) * weights).mean() with a Pallas kernel."""
    assert x.shape == weights.shape, "x and weights must have the same shape"
    total = x.size
    assert total > 0

    xf = x.reshape(-1)
    wf = weights.reshape(-1)

    # Pad the flat length to a multiple of the lane width (tiny copy, only
    # when needed); padded elements are masked inside the kernel.
    padded = _round_up(total, LANES)
    if padded != total:
        xf = jnp.pad(xf, (0, padded - total))
        wf = jnp.pad(wf, (0, padded - total))
    rows = padded // LANES
    x2 = xf.reshape(rows, LANES)   # NOTE: no .astype -- keep native dtype.
    w2 = wf.reshape(rows, LANES)

    # Sublane granularity: 8 rows for 4-byte dtypes, 16 for 2-byte, 32 for 1B.
    itemsize = max(jnp.dtype(x2.dtype).itemsize, jnp.dtype(w2.dtype).itemsize)
    mult = max(8, 32 // max(int(itemsize), 1))
    row_tile = _round_up(min(rows, row_tile_cap), mult)

    total_steps = pl.cdiv(rows, row_tile)
    # Split the row loop into 2 chunks (one per TensorCore on megacore parts)
    # when it divides evenly; otherwise keep one sequential chunk.
    if total_steps >= 2 and total_steps % 2 == 0:
        num_chunks = 2
        steps_per_chunk = total_steps // 2
    else:
        num_chunks = 1
        steps_per_chunk = total_steps

    needs_mask = (padded != total) or (total_steps * row_tile != rows)

    kernel = functools.partial(
        _simmin_kernel,
        c_const=float(1.0 + margin),
        total=int(total),
        row_tile=int(row_tile),
        steps_per_chunk=int(steps_per_chunk),
        needs_mask=bool(needs_mask),
    )

    in_map = lambda c, i: (c * steps_per_chunk + i, 0)

    partials = pl.pallas_call(
        kernel,
        out_shape=jax.ShapeDtypeStruct((num_chunks * 8, LANES), jnp.float32),
        grid_spec=pltpu.PrefetchScalarGridSpec(
            num_scalar_prefetch=0,
            grid=(num_chunks, steps_per_chunk),
            in_specs=[
                pl.BlockSpec((row_tile, LANES), in_map),
                pl.BlockSpec((row_tile, LANES), in_map),
            ],
            out_specs=pl.BlockSpec((8, LANES), lambda c, i: (c, 0)),
        ),
        compiler_params=pltpu.CompilerParams(
            dimension_semantics=("parallel", "arbitrary"),
        ),
    )(x2, w2)

    # Tiny final reduction (<= num_chunks*8*128 floats) + mean + negate.
    return -jnp.sum(partials) / jnp.float32(total)


if __name__ == "__main__":
    key = jax.random.PRNGKey(0)
    kx, kw = jax.random.split(key)

    # Small NCHW-like input (similarity scores in (0, 1)) and weights.
    shape = (2, 4, 16, 16)
    x = jax.random.uniform(kx, shape, dtype=jnp.float32, minval=0.05, maxval=0.95)
    weights = jax.random.uniform(kw, shape, dtype=jnp.float32, minval=0.0, maxval=1.0)
    margin = 0.0

    loss = jax.block_until_ready(simmin_loss(x, weights, margin))
    ref = -jnp.mean(jnp.log(1.0 - x + margin) * weights)
    assert jnp.allclose(loss, ref, rtol=1e-5, atol=1e-5), (loss, ref)

    # Ragged bf16 case: exercises native-dtype streaming + masked partial tile.
    shape2 = (3, 5, 7, 11)  # 1155 elements, not a multiple of 128
    xb = jax.random.uniform(kx, shape2, minval=0.05, maxval=0.95).astype(jnp.bfloat16)
    wb = jax.random.uniform(kw, shape2, minval=0.0, maxval=1.0).astype(jnp.bfloat16)
    loss2 = jax.block_until_ready(simmin_loss(xb, wb, margin))
    ref2 = -jnp.mean(jnp.log(1.0 - xb.astype(jnp.float32) + margin)
                     * wb.astype(jnp.float32))
    assert jnp.allclose(loss2, ref2, rtol=1e-4, atol=1e-5), (loss2, ref2)

    print("KERNEL_OK")
</pallas_src>

<mosaic_0001>
module attributes {stable_mosaic.version = 11 : i64} {
  func.func @_simmin_kernel(%arg0: i32, %arg1: i32, %arg2: memref<16x128xf32, #tpu.memory_space<vmem>>, %arg3: memref<16x128xf32, #tpu.memory_space<vmem>>, %arg4: memref<8x128xf32, #tpu.memory_space<vmem>>) attributes {dimension_semantics = [#tpu.dimension_semantics<parallel>, #tpu.dimension_semantics<arbitrary>], iteration_bounds = array<i64: 1, 1>, scalar_prefetch = 0 : i64, scratch_operands = 0 : i64, tpu.core_type = #tpu.core_type<tc>, window_params = [{transform_indices = @transform_0, window_bounds = array<i64: 16, 128>}, {transform_indices = @transform_1, window_bounds = array<i64: 16, 128>}, {transform_indices = @transform_2, window_bounds = array<i64: 8, 128>}]} {
    %c0_i32 = arith.constant 0 : i32
    %0 = arith.cmpi eq, %arg1, %c0_i32 : i32
    %1 = arith.extui %0 : i1 to i32
    %c0_i32_0 = arith.constant 0 : i32
    %2 = arith.cmpi ne, %1, %c0_i32_0 : i32
    scf.if %2 {
      %cst_9 = arith.constant 0.000000e+00 : f32
      %14 = vector.broadcast %cst_9 : f32 to vector<8x128xf32>
      %c0_10 = arith.constant 0 : index
      %c0_11 = arith.constant 0 : index
      %15 = vector.load %arg4[%c0_10, %c0_11] : memref<8x128xf32, #tpu.memory_space<vmem>>, vector<8x128xf32>
      tpu.vector_store %arg4[%c0_10, %c0_11], %14 {strides = array<i32>} : memref<8x128xf32, #tpu.memory_space<vmem>>, vector<8x128xf32>,
    } else {
    }
    %c0 = arith.constant 0 : index
    %c0_1 = arith.constant 0 : index
    %3 = vector.load %arg2[%c0, %c0_1] : memref<16x128xf32, #tpu.memory_space<vmem>>, vector<16x128xf32>
    %c0_2 = arith.constant 0 : index
    %c0_3 = arith.constant 0 : index
    %4 = vector.load %arg3[%c0_2, %c0_3] : memref<16x128xf32, #tpu.memory_space<vmem>>, vector<16x128xf32>
    %cst = arith.constant 1.000000e+00 : f32
    %5 = vector.broadcast %cst : f32 to vector<16x128xf32>
    %6 = arith.subf %5, %3 : vector<16x128xf32>
    %7 = math.log %6 : vector<16x128xf32>
    %8 = arith.mulf %7, %4 : vector<16x128xf32>
    %c0_4 = arith.constant 0 : index
    %c0_5 = arith.constant 0 : index
    %9 = vector.load %arg4[%c0_4, %c0_5] : memref<8x128xf32, #tpu.memory_space<vmem>>, vector<8x128xf32>
    %10 = vector.shape_cast %8 : vector<16x128xf32> to vector<2x8x128xf32>
    %cst_6 = arith.constant dense<0.000000e+00> : vector<8x128xf32>
    %11 = vector.multi_reduction <add>, %10, %cst_6 [0] : vector<2x8x128xf32> to vector<8x128xf32>
    %12 = arith.addf %9, %11 : vector<8x128xf32>
    %c0_7 = arith.constant 0 : index
    %c0_8 = arith.constant 0 : index
    %13 = vector.load %arg4[%c0_7, %c0_8] : memref<8x128xf32, #tpu.memory_space<vmem>>, vector<8x128xf32>
    tpu.vector_store %arg4[%c0_7, %c0_8], %12 {strides = array<i32>} : memref<8x128xf32, #tpu.memory_space<vmem>>, vector<8x128xf32>,
    return
  }
  func.func @transform_0(%arg0: i32, %arg1: i32) -> (i32, i32) {
    %c1_i32 = arith.constant 1 : i32
    %0 = arith.muli %arg0, %c1_i32 : i32
    %1 = arith.addi %0, %arg1 : i32
    %c0_i32 = arith.constant 0 : i32
    %c0_i32_0 = arith.constant 0 : i32
    return %1, %c0_i32 : i32, i32
  }
  func.func @transform_1(%arg0: i32, %arg1: i32) -> (i32, i32) {
    %c1_i32 = arith.constant 1 : i32
    %0 = arith.muli %arg0, %c1_i32 : i32
    %1 = arith.addi %0, %arg1 : i32
    %c0_i32 = arith.constant 0 : i32
    %c0_i32_0 = arith.constant 0 : i32
    return %1, %c0_i32 : i32, i32
  }
  func.func @transform_2(%arg0: i32, %arg1: i32) -> (i32, i32) {
    %c0_i32 = arith.constant 0 : i32
    %c0_i32_0 = arith.constant 0 : i32
    return %arg0, %c0_i32 : i32, i32
  }
}

</mosaic_0001>

<llo_original>
// kernel: tpu_custom_call.1
$region0: #{tpu_custom_call.1}
  #allocation0 [shape = 'u32[]', space=smem, size = 0x4, offset = 0x4, fixed_abs, tag = 'smem constant byte address 0x4 - core index']
  #allocation1 [shape = 'u32[144,128]{1,0:T(1,128)}', space=vmem, size = 0x12000, scoped, tag = 'internal scratch']
  %s0 = inlined_call_operand.hbm [shape: f32[16,128], index: 0, kind: input, shape index: {}]
  %s1 = inlined_call_operand.hbm [shape: f32[16,128], index: 1, kind: input, shape index: {}]
  %s2 = inlined_call_operand.hbm [shape: f32[8,128], index: 2, kind: output, shape index: {}]
  %s3 = sld [smem:[#allocation0]]
  $region30: #{tpu_custom_call.1} parent=0
    _
  %s5 = ssub.s32 1, %s3
  %s6 = scalar_select 0, %s5, %s3
  $region1: #{tpu_custom_call.1} parent=0
    #allocation2 [shape = 'u8[8192]{0}', space=vmem, size = 0x2000, scoped, tag = 'input window, operand 0, single buffered']
    #allocation3 [shape = 's32[1]{0}', space=sflag, size = 0x4, scoped, tag = 'scoped memory for tpu_custom_call.1']
    #allocation4 [shape = 's32[1]{0}', space=sflag, size = 0x4, scoped, tag = 'scoped memory for tpu_custom_call.1']
    #allocation5 [shape = 'u8[8192]{0}', space=vmem, size = 0x2000, scoped, tag = 'input window, operand 1, single buffered']
    #allocation6 [shape = 's32[1]{0}', space=sflag, size = 0x4, scoped, tag = 'scoped memory for tpu_custom_call.1']
    #allocation7 [shape = 'u8[4096]{0}', space=vmem, size = 0x1000, scoped, tag = 'output window, operand 0, single buffered']
    %7 = vsyncpa [#allocation3], 0
    %8 = vsyncpa [#allocation6], 0
    %9 = vsyncpa [#allocation4], 0
    // Predicated region
    $region2: #{tpu_custom_call.1} parent=1 // pred_check
      _
    $region3: #{tpu_custom_call.1} parent=1 // pred_check_branch
      %11 = sbr.rel (0) target = $region5
    $region4: #{tpu_custom_call.1} parent=1 // pred_region
      %s12 = sadd.s32 0, 0
      %s13 = smul.u32 2, %s12
      %s15 = ssub.s32 256, 256
      %16 = vsyncadd [#allocation3], %s15
      %s17 = smul.addr %s13, 128
      %s18 = scalar_lea.hbm %s0, %s17
      %s19 = sshll.u32 [#allocation2], 4
      %s20 = int_to_ptr.vmem [resolvable:$true] %s19
      %25 = dma.hbm_to_vmem [thread:$0]  %s18, 256, %s20, [#allocation3], 128, 128, 8
    $region5: #{tpu_custom_call.1} parent=1 // pred_fallthru
      _
    // Predicated region
    $region6: #{tpu_custom_call.1} parent=1 // pred_check
      _
    $region7: #{tpu_custom_call.1} parent=1 // pred_check_branch
      %27 = sbr.rel (0) target = $region9
    $region8: #{tpu_custom_call.1} parent=1 // pred_region
      %s28 = sadd.s32 0, 0
      %s29 = smul.u32 2, %s28
      %s31 = ssub.s32 256, 256
      %32 = vsyncadd [#allocation6], %s31
      %s33 = smul.addr %s29, 128
      %s34 = scalar_lea.hbm %s1, %s33
      %s35 = sshll.u32 [#allocation5], 4
      %s36 = int_to_ptr.vmem [resolvable:$true] %s35
      %41 = dma.hbm_to_vmem [thread:$0]  %s34, 256, %s36, [#allocation6], 128, 128, 8
    $region9: #{tpu_custom_call.1} parent=1 // pred_fallthru
      _
    // Predicated region
    $region10: #{tpu_custom_call.1} parent=1 // pred_check
      _
    $region11: #{tpu_custom_call.1} parent=1 // pred_check_branch
      %43 = sbr.rel (0) target = $region13
    $region12: #{tpu_custom_call.1} parent=1 // pred_region
      %44 = dma.done [#allocation3], 256
    $region13: #{tpu_custom_call.1} parent=1 // pred_fallthru
      _
    // Predicated region
    $region14: #{tpu_custom_call.1} parent=1 // pred_check
      _
    $region15: #{tpu_custom_call.1} parent=1 // pred_check_branch
      %46 = sbr.rel (0) target = $region17
    $region16: #{tpu_custom_call.1} parent=1 // pred_region
      %47 = dma.done [#allocation6], 256
    $region17: #{tpu_custom_call.1} parent=1 // pred_fallthru
      _
    %s48 = sadd.s32 0, 0
    %s49 = smul.u32 2, %s48
    %s50 = sadd.s32 0, 0
    %s51 = smul.u32 2, %s50
    %p52 = scmp.eq.s32.totalorder 0, 0
    // Predicated region
    $region18: #{tpu_custom_call.1} parent=1 // pred_check
      %p53 = pneg %p52
    $region19: #{tpu_custom_call.1} parent=1 // pred_check_branch
      %55 = sbr.rel (%p53) target = $region21
    $region20: #{tpu_custom_call.1} parent=1 // pred_region
      %56 = vst [vmem:[#allocation7] sm:$0xff] 0.0
    $region21: #{tpu_custom_call.1} parent=1 // pred_fallthru
      _
    %v57 = vld [vmem:[#allocation2] sm:$0xff]
    %v58 = vld [vmem:[#allocation2 + $0x8] sm:$0xff]
    %v59 = vld [vmem:[#allocation5] sm:$0xff]
    %v60 = vld [vmem:[#allocation5 + $0x8] sm:$0xff]
    %v61 = vsub.f32 1.0, %v57
    %v62 = vsub.f32 1.0, %v58
    %v63 = vlog2.pop %v61
    %v64 = vmul.f32 %v63, 0.6931472
    %v65 = vlog2.pop %v62
    %v66 = vmul.f32 %v65, 0.6931472
    %v67 = vmul.f32 %v64, %v59
    %v68 = vmul.f32 %v66, %v60
    %v69 = vld [vmem:[#allocation7] sm:$0xff]
    %v70 = vadd.f32 %v67, %v68
    %v71 = vadd.f32 %v69, %v70
    %72 = vst [vmem:[#allocation7] sm:$0xff] %v71
    // Predicated region
    $region22: #{tpu_custom_call.1} parent=1 // pred_check
      _
    $region23: #{tpu_custom_call.1} parent=1 // pred_check_branch
      %74 = sbr.rel (0) target = $region25
    $region24: #{tpu_custom_call.1} parent=1 // pred_region
      %s76 = ssub.s32 128, 128
      %77 = vsyncadd [#allocation4], %s76
      %s79 = sshll.u32 [#allocation7], 4
      %s80 = int_to_ptr.vmem [resolvable:$true] %s79
      %82 = dma.vmem_to_hbm [thread:$0]  %s80, 128, %s2, [#allocation4]
    $region25: #{tpu_custom_call.1} parent=1 // pred_fallthru
      _
    // Predicated region
    $region26: #{tpu_custom_call.1} parent=1 // pred_check
      _
    $region27: #{tpu_custom_call.1} parent=1 // pred_check_branch
      %84 = sbr.rel (0) target = $region29
    $region28: #{tpu_custom_call.1} parent=1 // pred_region
      %85 = dma.done [#allocation4], 128
    $region29: #{tpu_custom_call.1} parent=1 // pred_fallthru
      _
    %86 = vsyncpa [#allocation3], 1
    %87 = vsyncpa [#allocation6], 1
    %88 = vsyncpa [#allocation4], 1

</llo_original>
